<compile_context>
chip_gen: v7x
topology: tpu7x:2x2x1
jax: 0.10.0
libtpu: 0.0.40
codegen_flags: <defaults>
</compile_context>

<pallas_src>
import jax
import jax.numpy as jnp
from jax.experimental import pallas as pl
from jax.experimental.pallas import tpu as pltpu


def _make_ce_kernel(domain: int, B: int, TB: int, C: int):
    """Build the kernel with `domain`, `B`, `TB`, `C` baked in as constants."""
    inv_B = 1.0 / float(B)
    needs_mask = (B % TB) != 0

    def kernel(x_ref, out_ref):
        i = pl.program_id(0)

        # zero the resident scalar accumulator on the first grid step
        @pl.when(i == 0)
        def _init():
            out_ref[...] = jnp.zeros_like(out_ref)

        x = x_ref[...].astype(jnp.float32)                       # (TB, C)

        # numerically-stable log-sum-exp over the class axis
        m = jnp.max(x, axis=-1, keepdims=True)                   # (TB, 1)
        lse = jnp.log(jnp.sum(jnp.exp(x - m), axis=-1, keepdims=True))

        # direct column read instead of one-hot * logprobs (static slice)
        xd = x[:, domain:domain + 1]                             # (TB, 1)
        per_sample = (m + lse) - xd                              # (TB, 1)

        if needs_mask:
            # mask rows of the (padded) last partial tile
            row = jax.lax.broadcasted_iota(jnp.int32, (TB, 1), 0) + i * TB
            per_sample = jnp.where(row < B, per_sample, 0.0)

        # accumulate tile sum into the resident (1, 1) output block
        out_ref[...] += jnp.sum(per_sample, keepdims=True)       # (1, 1)

        # finalize: scale by 1/B once, on the last grid step only
        @pl.when(i == pl.num_programs(0) - 1)
        def _fin():
            out_ref[...] *= inv_B

    return kernel


def cross_entropy_loss(logits: jax.Array, domain: int, num_classes: int = 2) -> jax.Array:
    """Pallas equivalent of CrossEntropyLoss(num_classes).forward(logits, domain).

    logits: (B, C) float array with C == num_classes (f32 or bf16; bf16 halves
            the HBM traffic, upcast to f32 happens inside the kernel).
    domain: Python int / scalar — the single class index used for every row.
    Returns a float32 scalar.
    """
    B, C = logits.shape
    assert C == num_classes, "input class dim must match num_classes"
    domain = int(domain)
    assert 0 <= domain < C, "domain must be a valid class index"

    # Batch-tile sizing: largest tile that (a) keeps the double-buffered
    # footprint comfortably under every generation's scoped-VMEM default
    # (v5e 16 MiB is the smallest) and (b) satisfies the (8, 128) rule
    # (multiple of 8 rows, or the full batch dim).
    itemsize = jnp.dtype(logits.dtype).itemsize
    vmem_budget = 8 * 1024 * 1024                      # safe on v5e/v6e/v7x
    rows_by_vmem = max(8, vmem_budget // (2 * C * itemsize))
    tb_cap = max(8, min(512, (rows_by_vmem // 8) * 8))
    TB = B if B <= tb_cap else tb_cap

    grid = (pl.cdiv(B, TB),)

    out = pl.pallas_call(
        _make_ce_kernel(domain, B, TB, C),
        out_shape=jax.ShapeDtypeStruct((1, 1), jnp.float32),
        grid=grid,
        in_specs=[pl.BlockSpec((TB, C), lambda i: (i, 0))],
        # same output block for every grid step -> resident accumulator
        out_specs=pl.BlockSpec((1, 1), lambda i: (0, 0)),
        compiler_params=pltpu.CompilerParams(
            dimension_semantics=("arbitrary",),        # reduction axis
        ),
    )(logits)
    return out[0, 0]


def _reference(logits, domain):
    # pure-JAX reference of the PyTorch forward
    probs = jax.nn.softmax(logits.astype(jnp.float32), axis=1)
    label = jax.nn.one_hot(jnp.full((logits.shape[0],), domain), logits.shape[1],
                           dtype=jnp.float32)
    loss = -(jnp.log(probs) * label).sum(-1)
    return loss.mean(-1)


if __name__ == "__main__":
    key = jax.random.PRNGKey(0)

    # small shape consistent with the module: (B, num_classes=2)
    B, C = 8, 2
    logits = jax.random.normal(key, (B, C), dtype=jnp.float32)
    domain = 1

    result = cross_entropy_loss(logits, domain, num_classes=C)
    result = jax.block_until_ready(result)
    ref = _reference(logits, domain)
    assert jnp.allclose(result, ref, atol=1e-5, rtol=1e-5), (result, ref)

    # second check: exercises batch tiling + partial-tile masking path
    B2 = 1300
    logits2 = jax.random.normal(jax.random.PRNGKey(1), (B2, C), dtype=jnp.float32)
    result2 = jax.block_until_ready(cross_entropy_loss(logits2, 0, num_classes=C))
    ref2 = _reference(logits2, 0)
    assert jnp.allclose(result2, ref2, atol=1e-5, rtol=1e-5), (result2, ref2)

    print("KERNEL_OK")
</pallas_src>

<mosaic_0001>
module attributes {stable_mosaic.version = 11 : i64} {
  func.func @kernel(%arg0: i32, %arg1: memref<8x2xf32, #tpu.memory_space<vmem>>, %arg2: memref<1x1xf32, #tpu.memory_space<vmem>>) attributes {dimension_semantics = [#tpu.dimension_semantics<arbitrary>], iteration_bounds = array<i64: 1>, scalar_prefetch = 0 : i64, scratch_operands = 0 : i64, tpu.core_type = #tpu.core_type<tc>, window_params = [{transform_indices = @transform_0, window_bounds = array<i64: 8, 2>}, {pipeline_mode = #tpu.pipeline_mode<synchronous>, transform_indices = @transform_1, window_bounds = array<i64: 1, 1>}]} {
    %c0_i32 = arith.constant 0 : i32
    %0 = arith.cmpi eq, %arg0, %c0_i32 : i32
    %1 = arith.extui %0 : i1 to i32
    %c0_i32_0 = arith.constant 0 : i32
    %2 = arith.cmpi ne, %1, %c0_i32_0 : i32
    scf.if %2 {
      %cst_10 = arith.constant 0.000000e+00 : f32
      %26 = vector.broadcast %cst_10 : f32 to vector<1x1xf32>
      %c0_11 = arith.constant 0 : index
      %c0_12 = arith.constant 0 : index
      %27 = vector.load %arg2[%c0_11, %c0_12] : memref<1x1xf32, #tpu.memory_space<vmem>>, vector<1x1xf32>
      tpu.vector_store %arg2[%c0_11, %c0_12], %26 {strides = array<i32>} : memref<1x1xf32, #tpu.memory_space<vmem>>, vector<1x1xf32>,
    } else {
    }
    %c0 = arith.constant 0 : index
    %c0_1 = arith.constant 0 : index
    %3 = vector.load %arg1[%c0, %c0_1] : memref<8x2xf32, #tpu.memory_space<vmem>>, vector<8x2xf32>
    %cst = arith.constant dense<0xFF800000> : vector<8xf32>
    %4 = vector.multi_reduction <maximumf>, %3, %cst [1] : vector<8x2xf32> to vector<8xf32>
    %5 = vector.shape_cast %4 : vector<8xf32> to vector<8x1xf32>
    %6 = vector.broadcast %5 : vector<8x1xf32> to vector<8x2xf32>
    %7 = arith.subf %3, %6 : vector<8x2xf32>
    %8 = math.exp %7 : vector<8x2xf32>
    %cst_2 = arith.constant dense<0.000000e+00> : vector<8xf32>
    %9 = vector.multi_reduction <add>, %8, %cst_2 [1] : vector<8x2xf32> to vector<8xf32>
    %10 = vector.shape_cast %9 : vector<8xf32> to vector<8x1xf32>
    %11 = math.log %10 : vector<8x1xf32>
    %12 = vector.extract_strided_slice %3 {offsets = [0, 1], sizes = [8, 1], strides = [1, 1]} : vector<8x2xf32> to vector<8x1xf32>
    %13 = arith.addf %5, %11 : vector<8x1xf32>
    %14 = arith.subf %13, %12 : vector<8x1xf32>
    %c0_3 = arith.constant 0 : index
    %c0_4 = arith.constant 0 : index
    %15 = vector.load %arg2[%c0_3, %c0_4] : memref<1x1xf32, #tpu.memory_space<vmem>>, vector<1x1xf32>
    %16 = vector.shape_cast %14 : vector<8x1xf32> to vector<1x8x1xf32>
    %cst_5 = arith.constant dense<0.000000e+00> : vector<1xf32>
    %17 = vector.multi_reduction <add>, %16, %cst_5 [1, 2] : vector<1x8x1xf32> to vector<1xf32>
    %18 = vector.shape_cast %17 : vector<1xf32> to vector<1x1x1xf32>
    %19 = vector.extract %18[0, 0, 0] : f32 from vector<1x1x1xf32>
    %20 = vector.broadcast %19 : f32 to vector<1x1xf32>
    %21 = arith.addf %15, %20 : vector<1x1xf32>
    %c0_6 = arith.constant 0 : index
    %c0_7 = arith.constant 0 : index
    %22 = vector.load %arg2[%c0_6, %c0_7] : memref<1x1xf32, #tpu.memory_space<vmem>>, vector<1x1xf32>
    tpu.vector_store %arg2[%c0_6, %c0_7], %21 {strides = array<i32>} : memref<1x1xf32, #tpu.memory_space<vmem>>, vector<1x1xf32>,
    %c0_i32_8 = arith.constant 0 : i32
    %23 = arith.cmpi eq, %arg0, %c0_i32_8 : i32
    %24 = arith.extui %23 : i1 to i32
    %c0_i32_9 = arith.constant 0 : i32
    %25 = arith.cmpi ne, %24, %c0_i32_9 : i32
    scf.if %25 {
      %c0_10 = arith.constant 0 : index
      %c0_11 = arith.constant 0 : index
      %26 = vector.load %arg2[%c0_10, %c0_11] : memref<1x1xf32, #tpu.memory_space<vmem>>, vector<1x1xf32>
      %cst_12 = arith.constant 1.250000e-01 : f32
      %27 = vector.broadcast %cst_12 : f32 to vector<1x1xf32>
      %28 = arith.mulf %26, %27 : vector<1x1xf32>
      %c0_13 = arith.constant 0 : index
      %c0_14 = arith.constant 0 : index
      %29 = vector.load %arg2[%c0_13, %c0_14] : memref<1x1xf32, #tpu.memory_space<vmem>>, vector<1x1xf32>
      tpu.vector_store %arg2[%c0_13, %c0_14], %28 {strides = array<i32>} : memref<1x1xf32, #tpu.memory_space<vmem>>, vector<1x1xf32>,
    } else {
    }
    return
  }
  func.func @transform_0(%arg0: i32) -> (i32, i32) {
    %c0_i32 = arith.constant 0 : i32
    %c0_i32_0 = arith.constant 0 : i32
    return %arg0, %c0_i32 : i32, i32
  }
  func.func @transform_1(%arg0: i32) -> (i32, i32) {
    %c0_i32 = arith.constant 0 : i32
    %c0_i32_0 = arith.constant 0 : i32
    %c0_i32_1 = arith.constant 0 : i32
    return %c0_i32, %c0_i32_0 : i32, i32
  }
}

</mosaic_0001>

<llo_original>
// kernel: tpu_custom_call.1
$region0: #{tpu_custom_call.1}
  #allocation0 [shape = 'u32[]', space=smem, size = 0x4, offset = 0x4, fixed_abs, tag = 'smem constant byte address 0x4 - core index']
  #allocation1 [shape = 'u32[144,128]{1,0:T(1,128)}', space=vmem, size = 0x12000, scoped, tag = 'internal scratch']
  %s0 = inlined_call_operand.vmem [shape: f32[8,2], index: 0, kind: input, shape index: {}]
  %s1 = inlined_call_operand.hbm [shape: f32[1,1], index: 1, kind: output, shape index: {}]
  %s2 = sld [smem:[#allocation0]]
  $region22: #{tpu_custom_call.1} parent=0
    _
  %s4 = ssub.s32 1, %s2
  %s5 = scalar_select 0, %s4, %s2
  $region1: #{tpu_custom_call.1} parent=0
    #allocation2 [shape = 'u8[512]{0}', space=vmem, size = 0x400, scoped, tag = 'output window, operand 0, single buffered']
    #allocation3 [shape = 's32[1]{0}', space=sflag, size = 0x4, scoped, tag = 'scoped memory for tpu_custom_call.1']
    %6 = vsyncpa [#allocation3], 0
    // Predicated region
    $region2: #{tpu_custom_call.1} parent=1 // pred_check
      _
    $region3: #{tpu_custom_call.1} parent=1 // pred_check_branch
      %8 = sbr.rel (0) target = $region5
    $region4: #{tpu_custom_call.1} parent=1 // pred_region
      _
    $region5: #{tpu_custom_call.1} parent=1 // pred_fallthru
      _
    %p9 = scmp.eq.s32.totalorder 0, 0
    // Predicated region
    $region6: #{tpu_custom_call.1} parent=1 // pred_check
      %p10 = pneg %p9
    $region7: #{tpu_custom_call.1} parent=1 // pred_check_branch
      %12 = sbr.rel (%p10) target = $region9
    $region8: #{tpu_custom_call.1} parent=1 // pred_region
      %vm13 = vcmask 0
      %14 = vst.msk [vmem:[#allocation2] sm:$0x1] %vm13, 0.0
    $region9: #{tpu_custom_call.1} parent=1 // pred_fallthru
      _
    %v15 = vld [vmem:[%s0] sm:$0xff]
    %vm16 = vcmask 15360
    %v17 = vsel %vm16, %v15, -inf
    %18 = vmax.xlane.f32.xlu0 %v17
    %v19 = vpop.xlane.xlu0 %18
    %v20 = vsub.f32 %v15, %v19
    %v21 = vmul.f32 %v20, 1.442695
    %v22 = vpow.pop %v21
    %v23 = vsel %vm16, %v22, 0.0
    %24 = vadd.xlane.f32.xlu0 %v23
    %v25 = vpop.xlane.xlu0 %24
    %v26 = vlog2.pop %v25
    %v27 = vmul.f32 %v26, 0.6931472
    %v28 = vadd.f32 %v19, %v27
    %v29 = vsub.f32 %v28, %v15
    %v30 = vld [vmem:[#allocation2] sm:$0x1]
    %32 = vrot.lane.b32.xlu0 %v29, 127
    %v33 = vpop.permute.xlu0 %32
    %vm35 = vcmask 7168
    %v36 = vsel %vm35, %v33, 0.0
    %37 = vadd.xlane.f32.xlu0 %v36
    %v38 = vpop.xlane.xlu0 %37
    %v39 = vrot.slane %v38, 4
    %v40 = vadd.f32 %v38, %v39
    %v41 = vrot.slane %v40, 2
    %v42 = vadd.f32 %v40, %v41
    %v43 = vrot.slane %v42, 1
    %v44 = vadd.f32 %v42, %v43
    %s45 = vtos %v44
    %v46 = vstv %s45
    %v47 = vadd.f32 %v30, %v46
    %vm48 = vcmask 0
    %49 = vst.msk [vmem:[#allocation2] sm:$0x1] %vm48, %v47
    // Predicated region
    $region10: #{tpu_custom_call.1} parent=1 // pred_check
      %p50 = pneg %p9
    $region11: #{tpu_custom_call.1} parent=1 // pred_check_branch
      %52 = sbr.rel (%p50) target = $region13
    $region12: #{tpu_custom_call.1} parent=1 // pred_region
      %v53 = vld [vmem:[#allocation2] sm:$0x1]
      %v54 = vmul.f32 %v53, 0.125
      %55 = vst.msk [vmem:[#allocation2] sm:$0x1] %vm48, %v54
    $region13: #{tpu_custom_call.1} parent=1 // pred_fallthru
      _
    // Predicated region
    $region14: #{tpu_custom_call.1} parent=1 // pred_check
      _
    $region15: #{tpu_custom_call.1} parent=1 // pred_check_branch
      %57 = sbr.rel (0) target = $region17
    $region16: #{tpu_custom_call.1} parent=1 // pred_region
      %s59 = ssub.s32 16, 16
      %60 = vsyncadd [#allocation3], %s59
      %s62 = sshll.u32 [#allocation2], 4
      %s63 = int_to_ptr.vmem [resolvable:$true] %s62
      %65 = dma.vmem_to_hbm [thread:$0]  %s63, 16, %s1, [#allocation3]
    $region17: #{tpu_custom_call.1} parent=1 // pred_fallthru
      _
    // Predicated region
    $region18: #{tpu_custom_call.1} parent=1 // pred_check
      _
    $region19: #{tpu_custom_call.1} parent=1 // pred_check_branch
      %67 = sbr.rel (0) target = $region21
    $region20: #{tpu_custom_call.1} parent=1 // pred_region
      %68 = dma.done [#allocation3], 16
    $region21: #{tpu_custom_call.1} parent=1 // pred_fallthru
      _
    %69 = vsyncpa [#allocation3], 1

</llo_original>
